<compile_context>
chip_gen: v6e
topology: v6e:2x2x1
jax: 0.10.0
libtpu: 0.0.40
codegen_flags: <defaults>
</compile_context>

<pallas_src>
import functools

import jax
import jax.numpy as jnp
from jax.experimental import pallas as pl
from jax.experimental.pallas import tpu as pltpu


# Fixed embedding widths from the reference module.
CATE_DIMS = dict(interaction=2, test=128, question=256, tag=128, cluster_hour=3)
CATE_EMB_DIM = sum(CATE_DIMS.values())   # 517
CONT_DIM = 4                             # Tagrate, answerrate, elapsed, cumAnswerRate


# ----------------------------- tiling helpers ------------------------------


def _row_tile(m, cap=256):
    """Largest multiple-of-8 row tile <= cap that still gives >1 grid blocks."""
    best = m
    for t in (8, 16, 32, 64, 128, 256):
        if t <= cap and m % t == 0 and t < m:
            best = t
    return best


def _col_tile(n, cap=512):
    if n <= cap:
        return n
    for t in (512, 256, 128):
        if n % t == 0:
            return t
    return n


# ------------------- fused input projection (LN + LN + comb) ----------------


def _input_proj_kernel(cate_ref, cont_ref,
                       gcate_ref, bcate_ref,
                       wcont_ref, bcont_ref, gcont_ref, b2cont_ref,
                       wcomb_cate_ref, wcomb_cont_ref, bcomb_ref,
                       o_ref, *, eps):
    # --- categorical LayerNorm (f32) ---
    xc = cate_ref[...]
    mu = jnp.mean(xc, axis=-1, keepdims=True)
    d = xc - mu
    var = jnp.mean(d * d, axis=-1, keepdims=True)
    cate_n = d * jax.lax.rsqrt(var + eps) * gcate_ref[...] + bcate_ref[...]

    # --- continuous Linear(4,4) + LayerNorm (tiny, f32) ---
    cc = jnp.dot(cont_ref[...], wcont_ref[...],
                 preferred_element_type=jnp.float32) + bcont_ref[...]
    mu2 = jnp.mean(cc, axis=-1, keepdims=True)
    d2 = cc - mu2
    var2 = jnp.mean(d2 * d2, axis=-1, keepdims=True)
    cont_n = d2 * jax.lax.rsqrt(var2 + eps) * gcont_ref[...] + b2cont_ref[...]

    # --- comb_proj, split so the 521-wide concat is never materialised ---
    y = jnp.dot(cate_n.astype(jnp.bfloat16), wcomb_cate_ref[...],
                preferred_element_type=jnp.float32)
    y = y + jnp.dot(cont_n.astype(jnp.bfloat16), wcomb_cont_ref[...],
                    preferred_element_type=jnp.float32)
    o_ref[...] = y + bcomb_ref[...]


def input_projection(embed_cate, cat_cont, p, hidden, eps=1e-12):
    m, dcate = embed_cate.shape
    dcont = cat_cont.shape[1]
    tm = _row_tile(m)

    def full(shape):
        return pl.BlockSpec(shape, lambda i: tuple(0 for _ in shape))

    return pl.pallas_call(
        functools.partial(_input_proj_kernel, eps=eps),
        out_shape=jax.ShapeDtypeStruct((m, hidden), jnp.float32),
        grid=(m // tm,),
        in_specs=[
            pl.BlockSpec((tm, dcate), lambda i: (i, 0)),
            pl.BlockSpec((tm, dcont), lambda i: (i, 0)),
            full((1, dcate)), full((1, dcate)),
            full((dcont, dcont)), full((1, dcont)),
            full((1, dcont)), full((1, dcont)),
            full((dcate, hidden)), full((dcont, hidden)), full((1, hidden)),
        ],
        out_specs=pl.BlockSpec((tm, hidden), lambda i: (i, 0)),
        compiler_params=pltpu.CompilerParams(
            dimension_semantics=("parallel",)),
    )(embed_cate, cat_cont,
      p["cate_ln_g"], p["cate_ln_b"],
      p["cont_w"], p["cont_b"], p["cont_ln_g"], p["cont_ln_b"],
      p["comb_w_cate"], p["comb_w_cont"], p["comb_b"])


# -------------------- tiled bf16 linear (gate projection) -------------------


def _linear_bf16_kernel(x_ref, w_ref, b_ref, o_ref):
    y = jnp.dot(x_ref[...].astype(jnp.bfloat16), w_ref[...],
                preferred_element_type=jnp.float32)
    o_ref[...] = y + b_ref[...]


def linear_bf16(x, w_bf16, b):
    """y = x @ W + b, row/col tiled, bf16 MXU inputs, f32 accumulation."""
    m, k = x.shape
    n = w_bf16.shape[1]
    tm = _row_tile(m)
    tn = _col_tile(n)
    # NOTE: K (= hidden) is kept whole here; for large K add a third
    # "arbitrary" grid axis with a VMEM f32 accumulator (pl.when init/store)
    # and re-budget tiles for v7x's 64 MiB VMEM.
    return pl.pallas_call(
        _linear_bf16_kernel,
        out_shape=jax.ShapeDtypeStruct((m, n), jnp.float32),
        grid=(m // tm, n // tn),
        in_specs=[
            pl.BlockSpec((tm, k), lambda i, j: (i, 0)),
            pl.BlockSpec((k, tn), lambda i, j: (0, j)),
            pl.BlockSpec((1, tn), lambda i, j: (0, j)),
        ],
        out_specs=pl.BlockSpec((tm, tn), lambda i, j: (i, j)),
        compiler_params=pltpu.CompilerParams(
            dimension_semantics=("parallel", "parallel")),
    )(x, w_bf16, b.reshape(1, n))


# ------------------------- LSTM recurrence kernel ---------------------------


def _lstm_step_kernel(gx_ref, whh_ref, h_ref, h_state, c_state, *, hidden):
    t = pl.program_id(0)

    @pl.when(t == 0)
    def _():
        h_state[...] = jnp.zeros_like(h_state)   # zero initial (h, c)
        c_state[...] = jnp.zeros_like(c_state)

    # gates = (x_t @ W_ih^T + b_ih + b_hh)   [precomputed, gx_ref]
    #         + h_{t-1} @ W_hh^T             [bf16 MXU, f32 acc]
    gates = gx_ref[...] + jnp.dot(
        h_state[...].astype(jnp.bfloat16), whh_ref[...],
        preferred_element_type=jnp.float32)

    # PyTorch gate order: i | f | g | o
    i = jax.nn.sigmoid(gates[:, 0 * hidden:1 * hidden])
    f = jax.nn.sigmoid(gates[:, 1 * hidden:2 * hidden])
    g = jnp.tanh(gates[:, 2 * hidden:3 * hidden])
    o = jax.nn.sigmoid(gates[:, 3 * hidden:4 * hidden])

    c = f * c_state[...] + i * g
    h = o * jnp.tanh(c)
    c_state[...] = c
    h_state[...] = h
    h_ref[...] = h


def lstm_layer(gates_x, w_hh_bf16, hidden):
    """gates_x: (S, B, 4H) time-major; returns h: (S, B, H)."""
    s, b, four_h = gates_x.shape
    return pl.pallas_call(
        functools.partial(_lstm_step_kernel, hidden=hidden),
        out_shape=jax.ShapeDtypeStruct((s, b, hidden), jnp.float32),
        grid=(s,),
        in_specs=[
            pl.BlockSpec((None, b, four_h), lambda t: (t, 0, 0)),
            pl.BlockSpec((hidden, four_h), lambda t: (0, 0)),
        ],
        out_specs=pl.BlockSpec((None, b, hidden), lambda t: (t, 0, 0)),
        scratch_shapes=[
            pltpu.VMEM((b, hidden), jnp.float32),   # h carry
            pltpu.VMEM((b, hidden), jnp.float32),   # c carry
        ],
        compiler_params=pltpu.CompilerParams(
            dimension_semantics=("arbitrary",)),    # recurrence: sequential
    )(gates_x, w_hh_bf16)


# -------------------------- fc (H -> 1) + sigmoid ----------------------------


def _fc_sigmoid_kernel(h_ref, w_ref, b_ref, o_ref):
    # VPU lane-reduction dot product (avoids an N=1 MXU matmul).
    logits = jnp.sum(h_ref[...] * w_ref[...], axis=-1, keepdims=True) + b_ref[...]
    o_ref[...] = jax.nn.sigmoid(logits)


def fc_sigmoid(h_flat, fc_w, fc_b):
    m, hid = h_flat.shape
    tm = _row_tile(m)
    # TODO(synk): output is 1 lane wide (masked stores); at scale fuse this
    # epilogue into the last recurrence step instead of a separate call.
    return pl.pallas_call(
        _fc_sigmoid_kernel,
        out_shape=jax.ShapeDtypeStruct((m, 1), jnp.float32),
        grid=(m // tm,),
        in_specs=[
            pl.BlockSpec((tm, hid), lambda i: (i, 0)),
            pl.BlockSpec((1, hid), lambda i: (0, 0)),
            pl.BlockSpec((1, 1), lambda i: (0, 0)),
        ],
        out_specs=pl.BlockSpec((tm, 1), lambda i: (i, 0)),
        compiler_params=pltpu.CompilerParams(
            dimension_semantics=("parallel",)),
    )(h_flat, fc_w.reshape(1, hid), fc_b.reshape(1, 1))


# --------------------------- parameters & forward ---------------------------


def _normal(key, shape, scale=0.05, dtype=jnp.float32):
    return (scale * jax.random.normal(key, shape, jnp.float32)).astype(dtype)


def init_params(key, cfg):
    H = cfg["hidden_dim"]
    keys = iter(jax.random.split(key, 16 + 4 * cfg["n_layers"]))
    p = {
        "emb_interaction": _normal(next(keys), (3, CATE_DIMS["interaction"])),
        "emb_test": _normal(next(keys), (cfg["n_test"] + 1, CATE_DIMS["test"])),
        "emb_question": _normal(next(keys),
                                (cfg["n_questions"] + 1, CATE_DIMS["question"])),
        "emb_tag": _normal(next(keys), (cfg["n_tag"] + 1, CATE_DIMS["tag"])),
        "emb_cluster_hour": _normal(next(keys),
                                    (cfg["n_cluster_hour"] + 1,
                                     CATE_DIMS["cluster_hour"])),
        "cate_ln_g": jnp.ones((1, CATE_EMB_DIM), jnp.float32),
        "cate_ln_b": jnp.zeros((1, CATE_EMB_DIM), jnp.float32),
        "cont_w": _normal(next(keys), (CONT_DIM, CONT_DIM)),
        "cont_b": jnp.zeros((1, CONT_DIM), jnp.float32),
        "cont_ln_g": jnp.ones((1, CONT_DIM), jnp.float32),
        "cont_ln_b": jnp.zeros((1, CONT_DIM), jnp.float32),
        # comb_proj Linear(521 -> H): stored transposed and row-split
        # (cate rows / cont rows) so no concat is needed in-kernel.
        "comb_w_cate": _normal(next(keys), (CATE_EMB_DIM, H), dtype=jnp.bfloat16),
        "comb_w_cont": _normal(next(keys), (CONT_DIM, H), dtype=jnp.bfloat16),
        "comb_b": jnp.zeros((1, H), jnp.float32),
        "fc_w": _normal(next(keys), (H,)),
        "fc_b": jnp.zeros((1,), jnp.float32),
        "layers": [],
    }
    for _ in range(cfg["n_layers"]):
        p["layers"].append({
            # W_ih^T: (input=H, 4H), W_hh^T: (H, 4H); gate order i|f|g|o.
            "w_ih": _normal(next(keys), (H, 4 * H), dtype=jnp.bfloat16),
            "w_hh": _normal(next(keys), (H, 4 * H), dtype=jnp.bfloat16),
            "b_gates": jnp.zeros((4 * H,), jnp.float32),   # b_ih + b_hh folded
        })
    return p


def lstm_forward(params, cfg, batch):
    (test, question, tag, _unused, tagrate, answerrate, elapsed,
     cum_answer_rate, cluster_hour, mask, interaction) = batch
    del _unused, mask   # unused by the reference forward pass
    B, S = interaction.shape
    H = cfg["hidden_dim"]

    # ---- embedding gathers (plain-JAX glue; no Pallas gather) ----
    embed_cate = jnp.concatenate([
        params["emb_interaction"][interaction],
        params["emb_test"][test],
        params["emb_question"][question],
        params["emb_tag"][tag],
        params["emb_cluster_hour"][cluster_hour],
    ], axis=-1)                                                   # (B, S, 517)
    cat_cont = jnp.stack(
        [tagrate, answerrate, elapsed, cum_answer_rate], axis=-1)  # (B, S, 4)

    # Time-major token slabs: row index = t * B + b.
    embed_cate = jnp.swapaxes(embed_cate, 0, 1).reshape(S * B, CATE_EMB_DIM)
    cat_cont = jnp.swapaxes(cat_cont, 0, 1).reshape(S * B, CONT_DIM)
    embed_cate = embed_cate.astype(jnp.float32)
    cat_cont = cat_cont.astype(jnp.float32)

    # Fused: cate LN + cont Linear+LN + comb_proj  -> X (S*B, H).
    x = input_projection(embed_cate, cat_cont, params, H)

    # ---- multi-layer LSTM, zero initial (h, c) ----
    for lp in params["layers"]:
        gates_x = linear_bf16(x, lp["w_ih"], lp["b_gates"])           # (S*B, 4H)
        h = lstm_layer(gates_x.reshape(S, B, 4 * H), lp["w_hh"], H)   # (S, B, H)
        x = h.reshape(S * B, H)
        # nn.LSTM inter-layer dropout is identity in eval mode.

    # ---- fc + sigmoid head ----
    preds = fc_sigmoid(x, params["fc_w"], params["fc_b"])             # (S*B, 1)
    return preds.reshape(S, B).T                                      # (B, S)


# ----------------------------------- main -----------------------------------

if __name__ == "__main__":
    B, S = 2, 8
    cfg = dict(
        hidden_dim=64,
        n_layers=2,
        n_test=5,
        n_questions=7,
        n_tag=6,
        n_cluster_hour=4,
        drop_out=0.1,   # train-only; identity here (eval)
    )

    root = jax.random.PRNGKey(0)
    pkey, dkey = jax.random.split(root)
    params = init_params(pkey, cfg)

    ks = jax.random.split(dkey, 10)
    test = jax.random.randint(ks[0], (B, S), 0, cfg["n_test"] + 1)
    question = jax.random.randint(ks[1], (B, S), 0, cfg["n_questions"] + 1)
    tag = jax.random.randint(ks[2], (B, S), 0, cfg["n_tag"] + 1)
    cluster_hour = jax.random.randint(ks[3], (B, S), 0, cfg["n_cluster_hour"] + 1)
    interaction = jax.random.randint(ks[4], (B, S), 0, 3)
    tagrate = jax.random.uniform(ks[5], (B, S), jnp.float32)
    answerrate = jax.random.uniform(ks[6], (B, S), jnp.float32)
    elapsed = jax.random.uniform(ks[7], (B, S), jnp.float32)
    cum_answer_rate = jax.random.uniform(ks[8], (B, S), jnp.float32)
    correct = jax.random.randint(ks[9], (B, S), 0, 2)     # unused "_" slot
    mask = jnp.concatenate(
        [jnp.ones((B, S - 2)), jnp.zeros((B, 2))], axis=1).astype(jnp.float32)

    batch = (test, question, tag, correct, tagrate, answerrate, elapsed,
             cum_answer_rate, cluster_hour, mask, interaction)

    preds = lstm_forward(params, cfg, batch)
    preds = jax.block_until_ready(preds)
    assert preds.shape == (B, S)
    assert bool(jnp.all(jnp.isfinite(preds)))
    assert bool(jnp.all((preds >= 0.0) & (preds <= 1.0)))
    print("KERNEL_OK")
</pallas_src>

<mosaic_0001>
module attributes {stable_mosaic.version = 11 : i64} {
  func.func @_input_proj_kernel(%arg0: i32, %arg1: memref<8x517xf32, #tpu.memory_space<vmem>>, %arg2: memref<8x4xf32, #tpu.memory_space<vmem>>, %arg3: memref<1x517xf32, #tpu.memory_space<vmem>>, %arg4: memref<1x517xf32, #tpu.memory_space<vmem>>, %arg5: memref<4x4xf32, #tpu.memory_space<vmem>>, %arg6: memref<1x4xf32, #tpu.memory_space<vmem>>, %arg7: memref<1x4xf32, #tpu.memory_space<vmem>>, %arg8: memref<1x4xf32, #tpu.memory_space<vmem>>, %arg9: memref<517x64xbf16, #tpu.memory_space<vmem>>, %arg10: memref<4x64xbf16, #tpu.memory_space<vmem>>, %arg11: memref<1x64xf32, #tpu.memory_space<vmem>>, %arg12: memref<8x64xf32, #tpu.memory_space<vmem>>) attributes {dimension_semantics = [#tpu.dimension_semantics<parallel>], iteration_bounds = array<i64: 2>, scalar_prefetch = 0 : i64, scratch_operands = 0 : i64, tpu.core_type = #tpu.core_type<tc>, window_params = [{transform_indices = @transform_0, window_bounds = array<i64: 8, 517>}, {transform_indices = @transform_1, window_bounds = array<i64: 8, 4>}, {pipeline_mode = #tpu.pipeline_mode<synchronous>, transform_indices = @transform_2, window_bounds = array<i64: 1, 517>}, {pipeline_mode = #tpu.pipeline_mode<synchronous>, transform_indices = @transform_3, window_bounds = array<i64: 1, 517>}, {pipeline_mode = #tpu.pipeline_mode<synchronous>, transform_indices = @transform_4, window_bounds = array<i64: 4, 4>}, {pipeline_mode = #tpu.pipeline_mode<synchronous>, transform_indices = @transform_5, window_bounds = array<i64: 1, 4>}, {pipeline_mode = #tpu.pipeline_mode<synchronous>, transform_indices = @transform_6, window_bounds = array<i64: 1, 4>}, {pipeline_mode = #tpu.pipeline_mode<synchronous>, transform_indices = @transform_7, window_bounds = array<i64: 1, 4>}, {pipeline_mode = #tpu.pipeline_mode<synchronous>, transform_indices = @transform_8, window_bounds = array<i64: 517, 64>}, {pipeline_mode = #tpu.pipeline_mode<synchronous>, transform_indices = @transform_9, window_bounds = array<i64: 4, 64>}, {pipeline_mode = #tpu.pipeline_mode<synchronous>, transform_indices = @transform_10, window_bounds = array<i64: 1, 64>}, {transform_indices = @transform_11, window_bounds = array<i64: 8, 64>}]} {
    %c0 = arith.constant 0 : index
    %c0_0 = arith.constant 0 : index
    %0 = vector.load %arg1[%c0, %c0_0] : memref<8x517xf32, #tpu.memory_space<vmem>>, vector<8x517xf32>
    %cst = arith.constant dense<0.000000e+00> : vector<8xf32>
    %1 = vector.multi_reduction <add>, %0, %cst [1] : vector<8x517xf32> to vector<8xf32>
    %2 = vector.shape_cast %1 : vector<8xf32> to vector<8x1xf32>
    %cst_1 = arith.constant 5.170000e+02 : f32
    %3 = vector.broadcast %cst_1 : f32 to vector<8x1xf32>
    %4 = arith.divf %2, %3 : vector<8x1xf32>
    %5 = vector.broadcast %4 : vector<8x1xf32> to vector<8x517xf32>
    %6 = arith.subf %0, %5 : vector<8x517xf32>
    %7 = arith.mulf %6, %6 : vector<8x517xf32>
    %cst_2 = arith.constant dense<0.000000e+00> : vector<8xf32>
    %8 = vector.multi_reduction <add>, %7, %cst_2 [1] : vector<8x517xf32> to vector<8xf32>
    %9 = vector.shape_cast %8 : vector<8xf32> to vector<8x1xf32>
    %cst_3 = arith.constant 5.170000e+02 : f32
    %10 = vector.broadcast %cst_3 : f32 to vector<8x1xf32>
    %11 = arith.divf %9, %10 : vector<8x1xf32>
    %cst_4 = arith.constant 9.99999996E-13 : f32
    %12 = vector.broadcast %cst_4 : f32 to vector<8x1xf32>
    %13 = arith.addf %11, %12 : vector<8x1xf32>
    %14 = math.rsqrt %13 : vector<8x1xf32>
    %15 = vector.broadcast %14 : vector<8x1xf32> to vector<8x517xf32>
    %16 = arith.mulf %6, %15 : vector<8x517xf32>
    %c0_5 = arith.constant 0 : index
    %c0_6 = arith.constant 0 : index
    %17 = vector.load %arg3[%c0_5, %c0_6] : memref<1x517xf32, #tpu.memory_space<vmem>>, vector<1x517xf32>
    %18 = vector.broadcast %17 : vector<1x517xf32> to vector<8x517xf32>
    %19 = arith.mulf %16, %18 : vector<8x517xf32>
    %c0_7 = arith.constant 0 : index
    %c0_8 = arith.constant 0 : index
    %20 = vector.load %arg4[%c0_7, %c0_8] : memref<1x517xf32, #tpu.memory_space<vmem>>, vector<1x517xf32>
    %21 = vector.broadcast %20 : vector<1x517xf32> to vector<8x517xf32>
    %22 = arith.addf %19, %21 : vector<8x517xf32>
    %c0_9 = arith.constant 0 : index
    %c0_10 = arith.constant 0 : index
    %23 = vector.load %arg2[%c0_9, %c0_10] : memref<8x4xf32, #tpu.memory_space<vmem>>, vector<8x4xf32>
    %c0_11 = arith.constant 0 : index
    %c0_12 = arith.constant 0 : index
    %24 = vector.load %arg5[%c0_11, %c0_12] : memref<4x4xf32, #tpu.memory_space<vmem>>, vector<4x4xf32>
    %cst_13 = arith.constant dense<0.000000e+00> : vector<8x4xf32>
    %25 = tpu.matmul %23, %24, %cst_13 {dimension_numbers = #tpu.dot_dimension_numbers<[1], [0], [0], [1], [0, 0, 1, 1], [], []>} : vector<8x4xf32>, vector<4x4xf32>, vector<8x4xf32> -> vector<8x4xf32>
    %c0_14 = arith.constant 0 : index
    %c0_15 = arith.constant 0 : index
    %26 = vector.load %arg6[%c0_14, %c0_15] : memref<1x4xf32, #tpu.memory_space<vmem>>, vector<1x4xf32>
    %27 = vector.broadcast %26 : vector<1x4xf32> to vector<8x4xf32>
    %28 = arith.addf %25, %27 : vector<8x4xf32>
    %cst_16 = arith.constant dense<0.000000e+00> : vector<8xf32>
    %29 = vector.multi_reduction <add>, %28, %cst_16 [1] : vector<8x4xf32> to vector<8xf32>
    %30 = vector.shape_cast %29 : vector<8xf32> to vector<8x1xf32>
    %cst_17 = arith.constant 4.000000e+00 : f32
    %31 = vector.broadcast %cst_17 : f32 to vector<8x1xf32>
    %32 = arith.divf %30, %31 : vector<8x1xf32>
    %33 = vector.broadcast %32 : vector<8x1xf32> to vector<8x4xf32>
    %34 = arith.subf %28, %33 : vector<8x4xf32>
    %35 = arith.mulf %34, %34 : vector<8x4xf32>
    %cst_18 = arith.constant dense<0.000000e+00> : vector<8xf32>
    %36 = vector.multi_reduction <add>, %35, %cst_18 [1] : vector<8x4xf32> to vector<8xf32>
    %37 = vector.shape_cast %36 : vector<8xf32> to vector<8x1xf32>
    %cst_19 = arith.constant 4.000000e+00 : f32
    %38 = vector.broadcast %cst_19 : f32 to vector<8x1xf32>
    %39 = arith.divf %37, %38 : vector<8x1xf32>
    %cst_20 = arith.constant 9.99999996E-13 : f32
    %40 = vector.broadcast %cst_20 : f32 to vector<8x1xf32>
    %41 = arith.addf %39, %40 : vector<8x1xf32>
    %42 = math.rsqrt %41 : vector<8x1xf32>
    %43 = vector.broadcast %42 : vector<8x1xf32> to vector<8x4xf32>
    %44 = arith.mulf %34, %43 : vector<8x4xf32>
    %c0_21 = arith.constant 0 : index
    %c0_22 = arith.constant 0 : index
    %45 = vector.load %arg7[%c0_21, %c0_22] : memref<1x4xf32, #tpu.memory_space<vmem>>, vector<1x4xf32>
    %46 = vector.broadcast %45 : vector<1x4xf32> to vector<8x4xf32>
    %47 = arith.mulf %44, %46 : vector<8x4xf32>
    %c0_23 = arith.constant 0 : index
    %c0_24 = arith.constant 0 : index
    %48 = vector.load %arg8[%c0_23, %c0_24] : memref<1x4xf32, #tpu.memory_space<vmem>>, vector<1x4xf32>
    %49 = vector.broadcast %48 : vector<1x4xf32> to vector<8x4xf32>
    %50 = arith.addf %47, %49 : vector<8x4xf32>
    %51 = arith.truncf %22 : vector<8x517xf32> to vector<8x517xbf16>
    %c0_25 = arith.constant 0 : index
    %c0_26 = arith.constant 0 : index
    %52 = vector.load %arg9[%c0_25, %c0_26] : memref<517x64xbf16, #tpu.memory_space<vmem>>, vector<517x64xbf16>
    %cst_27 = arith.constant dense<0.000000e+00> : vector<8x64xf32>
    %53 = tpu.matmul %51, %52, %cst_27 {dimension_numbers = #tpu.dot_dimension_numbers<[1], [0], [0], [1], [0, 0, 1, 1], [], []>} : vector<8x517xbf16>, vector<517x64xbf16>, vector<8x64xf32> -> vector<8x64xf32>
    %54 = arith.truncf %50 : vector<8x4xf32> to vector<8x4xbf16>
    %c0_28 = arith.constant 0 : index
    %c0_29 = arith.constant 0 : index
    %55 = vector.load %arg10[%c0_28, %c0_29] : memref<4x64xbf16, #tpu.memory_space<vmem>>, vector<4x64xbf16>
    %cst_30 = arith.constant dense<0.000000e+00> : vector<8x64xf32>
    %56 = tpu.matmul %54, %55, %cst_30 {dimension_numbers = #tpu.dot_dimension_numbers<[1], [0], [0], [1], [0, 0, 1, 1], [], []>} : vector<8x4xbf16>, vector<4x64xbf16>, vector<8x64xf32> -> vector<8x64xf32>
    %57 = arith.addf %53, %56 : vector<8x64xf32>
    %c0_31 = arith.constant 0 : index
    %c0_32 = arith.constant 0 : index
    %58 = vector.load %arg11[%c0_31, %c0_32] : memref<1x64xf32, #tpu.memory_space<vmem>>, vector<1x64xf32>
    %59 = vector.broadcast %58 : vector<1x64xf32> to vector<8x64xf32>
    %60 = arith.addf %57, %59 : vector<8x64xf32>
    %c0_33 = arith.constant 0 : index
    %c0_34 = arith.constant 0 : index
    %61 = vector.load %arg12[%c0_33, %c0_34] : memref<8x64xf32, #tpu.memory_space<vmem>>, vector<8x64xf32>
    tpu.vector_store %arg12[%c0_33, %c0_34], %60 {strides = array<i32>} : memref<8x64xf32, #tpu.memory_space<vmem>>, vector<8x64xf32>,
    return
  }
  func.func @transform_0(%arg0: i32) -> (i32, i32) {
    %c0_i32 = arith.constant 0 : i32
    %c0_i32_0 = arith.constant 0 : i32
    return %arg0, %c0_i32 : i32, i32
  }
  func.func @transform_1(%arg0: i32) -> (i32, i32) {
    %c0_i32 = arith.constant 0 : i32
    %c0_i32_0 = arith.constant 0 : i32
    return %arg0, %c0_i32 : i32, i32
  }
  func.func @transform_2(%arg0: i32) -> (i32, i32) {
    %c0_i32 = arith.constant 0 : i32
    %c0_i32_0 = arith.constant 0 : i32
    %c0_i32_1 = arith.constant 0 : i32
    return %c0_i32, %c0_i32_0 : i32, i32
  }
  func.func @transform_3(%arg0: i32) -> (i32, i32) {
    %c0_i32 = arith.constant 0 : i32
    %c0_i32_0 = arith.constant 0 : i32
    %c0_i32_1 = arith.constant 0 : i32
    return %c0_i32, %c0_i32_0 : i32, i32
  }
  func.func @transform_4(%arg0: i32) -> (i32, i32) {
    %c0_i32 = arith.constant 0 : i32
    %c0_i32_0 = arith.constant 0 : i32
    %c0_i32_1 = arith.constant 0 : i32
    return %c0_i32, %c0_i32_0 : i32, i32
  }
  func.func @transform_5(%arg0: i32) -> (i32, i32) {
    %c0_i32 = arith.constant 0 : i32
    %c0_i32_0 = arith.constant 0 : i32
    %c0_i32_1 = arith.constant 0 : i32
    return %c0_i32, %c0_i32_0 : i32, i32
  }
  func.func @transform_6(%arg0: i32) -> (i32, i32) {
    %c0_i32 = arith.constant 0 : i32
    %c0_i32_0 = arith.constant 0 : i32
    %c0_i32_1 = arith.constant 0 : i32
    return %c0_i32, %c0_i32_0 : i32, i32
  }
  func.func @transform_7(%arg0: i32) -> (i32, i32) {
    %c0_i32 = arith.constant 0 : i32
    %c0_i32_0 = arith.constant 0 : i32
    %c0_i32_1 = arith.constant 0 : i32
    return %c0_i32, %c0_i32_0 : i32, i32
  }
  func.func @transform_8(%arg0: i32) -> (i32, i32) {
    %c0_i32 = arith.constant 0 : i32
    %c0_i32_0 = arith.constant 0 : i32
    %c0_i32_1 = arith.constant 0 : i32
    return %c0_i32, %c0_i32_0 : i32, i32
  }
  func.func @transform_9(%arg0: i32) -> (i32, i32) {
    %c0_i32 = arith.constant 0 : i32
    %c0_i32_0 = arith.constant 0 : i32
    %c0_i32_1 = arith.constant 0 : i32
    return %c0_i32, %c0_i32_0 : i32, i32
  }
  func.func @transform_10(%arg0: i32) -> (i32, i32) {
    %c0_i32 = arith.constant 0 : i32
    %c0_i32_0 = arith.constant 0 : i32
    %c0_i32_1 = arith.constant 0 : i32
    return %c0_i32, %c0_i32_0 : i32, i32
  }
  func.func @transform_11(%arg0: i32) -> (i32, i32) {
    %c0_i32 = arith.constant 0 : i32
    %c0_i32_0 = arith.constant 0 : i32
    return %arg0, %c0_i32 : i32, i32
  }
}

</mosaic_0001>

<llo_original>
// kernel: tpu_custom_call.1
$region0: #{tpu_custom_call.1}
  #allocation0 [shape = 'u32[]', space=smem, size = 0x4, offset = 0x4, fixed_abs, tag = 'smem constant byte address 0x4 - core index']
  #allocation1 [shape = 'u32[144,128]{1,0:T(1,128)}', space=vmem, size = 0x12000, scoped, tag = 'internal scratch']
  %s0 = inlined_call_operand.vmem [shape: f32[16,517], index: 0, kind: input, shape index: {}]
  %s1 = inlined_call_operand.vmem [shape: f32[16,4], index: 1, kind: input, shape index: {}]
  %s2 = inlined_call_operand.vmem [shape: f32[1,517], index: 2, kind: input, shape index: {}]
  %s3 = inlined_call_operand.vmem [shape: f32[1,517], index: 3, kind: input, shape index: {}]
  %s4 = inlined_call_operand.vmem [shape: f32[4,4], index: 4, kind: input, shape index: {}]
  %s5 = inlined_call_operand.vmem [shape: f32[1,4], index: 5, kind: input, shape index: {}]
  %s6 = inlined_call_operand.vmem [shape: f32[1,4], index: 6, kind: input, shape index: {}]
  %s7 = inlined_call_operand.vmem [shape: f32[1,4], index: 7, kind: input, shape index: {}]
  %s8 = inlined_call_operand.vmem [shape: bf16[517,64], index: 8, kind: input, shape index: {}]
  %s9 = inlined_call_operand.vmem [shape: bf16[4,64], index: 9, kind: input, shape index: {}]
  %s10 = inlined_call_operand.vmem [shape: f32[1,64], index: 10, kind: input, shape index: {}]
  %s11 = inlined_call_operand.hbm [shape: f32[16,64], index: 11, kind: output, shape index: {}]
  %s12 = sld [smem:[#allocation0]]
  $region77: #{tpu_custom_call.1} parent=0
    _
  %s14 = ssub.s32 1, %s12
  %s15 = scalar_select 0, %s14, %s12
  $region1: #{tpu_custom_call.1} parent=0
    #allocation2 [shape = 'u8[8192]{0}', space=vmem, size = 0x2000, scoped, tag = 'output window, operand 0']
    #allocation3 [shape = 's32[2]{0}', space=sflag, size = 0x8, scoped, tag = 'scoped memory for tpu_custom_call.1']
    %16 = vsyncpa [#allocation3], 0
    %s17 = scalar_lea.sflag [#allocation3], 1
    %18 = vsyncpa %s17, 0
    loop: start=0, step=1, limit=4
    $region2: #{tpu_custom_call.1} parent=1 // loop_pre_header
      _
    $region3: #{tpu_custom_call.1} parent=1 // loop_header
      %s20 = sphi 0, %s24
      %p21 = scmp.ge.s32.totalorder %s20, 4
      %s30 = sphi 0, %s32
      %s33 = sphi 0, %s30
      %s34 = sphi 0, %s33
      %s50 = sphi 0, %s34
      %s56 = sphi 0, %s58
      %s59 = sphi 0, %s56
      %s60 = sphi 0, %s59
      %s76 = sphi 0, %s60
      %s80 = sphi 0, %s80
      %s82 = sphi 0, %s80
      %s83 = sphi 0, %s82
      %s97 = sphi 0, %s83
      %s101 = sphi 0, %s101
      %s103 = sphi 0, %s101
      %s104 = sphi 0, %s103
      %s118 = sphi 0, %s104
      %s122 = sphi 0, %s122
      %s124 = sphi 0, %s122
      %s125 = sphi 0, %s124
      %s139 = sphi 0, %s125
      %s143 = sphi 0, %s143
      %s145 = sphi 0, %s143
      %s146 = sphi 0, %s145
      %s160 = sphi 0, %s146
      %s164 = sphi 0, %s164
      %s166 = sphi 0, %s164
      %s167 = sphi 0, %s166
      %s181 = sphi 0, %s167
      %s185 = sphi 0, %s185
      %s187 = sphi 0, %s185
      %s188 = sphi 0, %s187
      %s202 = sphi 0, %s188
      %s206 = sphi 0, %s206
      %s208 = sphi 0, %s206
      %s209 = sphi 0, %s208
      %s223 = sphi 0, %s209
      %s227 = sphi 0, %s227
      %s229 = sphi 0, %s227
      %s230 = sphi 0, %s229
      %s244 = sphi 0, %s230
      %s248 = sphi 0, %s248
      %s250 = sphi 0, %s248
      %s251 = sphi 0, %s250
      %s265 = sphi 0, %s251
      %s271 = sphi 0, %s273
      %s274 = sphi 0, %s271
      %s275 = sphi 0, %s274
      %s291 = sphi 0, %s275
    $region4: #{tpu_custom_call.1} parent=1 // loop_header_branch
      %23 = sbr.rel (%p21) target = $region8
    $region5: #{tpu_custom_call.1} parent=1 // loop_body
      %s25 = ssub.s32 %s20, 1
      %s26 = ssub.s32 %s20, 2
      %s27 = sadd.s32 %s20, 1
      %s28 = ssub.s32 %s20, %s27
      %p29 = scmp.eq.s32.totalorder %s28, 0
      %s31 = sadd.s32 %s30, 1
      %s32 = scalar_select %p29, %s30, %s31
      %p35 = pneg %p29
      %p36 = scmp.eq.s32.totalorder %s20, 1
      %p37 = por %p35, %p36
      %p38 = scmp.ne.s32.totalorder %s30, %s33
      %p39 = scmp.eq.s32.totalorder %s20, 0
      %p40 = por %p38, %p39
      %p41 = scmp.ne.s32.totalorder %s30, %s33
      %p42 = scmp.eq.s32.totalorder %s25, 1
      %p43 = por %p41, %p42
      %p44 = scmp.ne.s32.totalorder %s33, %s34
      %p45 = scmp.eq.s32.totalorder %s25, 0
      %p46 = por %p44, %p45
      %p47 = scmp.ne.s32.totalorder %s33, %s34
      %p48 = scmp.eq.s32.totalorder %s26, 1
      %p49 = por %p47, %p48
      %p51 = scmp.ne.s32.totalorder %s34, %s50
      %p52 = scmp.eq.s32.totalorder %s26, 0
      %p53 = por %p51, %p52
      %s54 = ssub.s32 %s20, %s27
      %p55 = scmp.eq.s32.totalorder %s54, 0
      %s57 = sadd.s32 %s56, 1
      %s58 = scalar_select %p55, %s56, %s57
      %p61 = pneg %p55
      %p62 = scmp.eq.s32.totalorder %s20, 1
      %p63 = por %p61, %p62
      %p64 = scmp.ne.s32.totalorder %s56, %s59
      %p65 = scmp.eq.s32.totalorder %s20, 0
      %p66 = por %p64, %p65
      %p67 = scmp.ne.s32.totalorder %s56, %s59
      %p68 = scmp.eq.s32.totalorder %s25, 1
      %p69 = por %p67, %p68
      %p70 = scmp.ne.s32.totalorder %s59, %s60
      %p71 = scmp.eq.s32.totalorder %s25, 0
      %p72 = por %p70, %p71
      %p73 = scmp.ne.s32.totalorder %s59, %s60
      %p74 = scmp.eq.s32.totalorder %s26, 1
      %p75 = por %p73, %p74
      %p77 = scmp.ne.s32.totalorder %s60, %s76
      %p78 = scmp.eq.s32.totalorder %s26, 0
      %p79 = por %p77, %p78
      %s81 = sadd.s32 %s80, 1
      %p84 = scmp.eq.s32.totalorder %s20, 1
      %p85 = scmp.ne.s32.totalorder %s80, %s82
      %p86 = scmp.eq.s32.totalorder %s20, 0
      %p87 = por %p85, %p86
      %p88 = scmp.ne.s32.totalorder %s80, %s82
      %p89 = scmp.eq.s32.totalorder %s25, 1
      %p90 = por %p88, %p89
      %p91 = scmp.ne.s32.totalorder %s82, %s83
      %p92 = scmp.eq.s32.totalorder %s25, 0
      %p93 = por %p91, %p92
      %p94 = scmp.ne.s32.totalorder %s82, %s83
      %p95 = scmp.eq.s32.totalorder %s26, 1
      %p96 = por %p94, %p95
      %p98 = scmp.ne.s32.totalorder %s83, %s97
      %p99 = scmp.eq.s32.totalorder %s26, 0
      %p100 = por %p98, %p99
      %s102 = sadd.s32 %s101, 1
      %p105 = scmp.eq.s32.totalorder %s20, 1
      %p106 = scmp.ne.s32.totalorder %s101, %s103
      %p107 = scmp.eq.s32.totalorder %s20, 0
      %p108 = por %p106, %p107
      %p109 = scmp.ne.s32.totalorder %s101, %s103
      %p110 = scmp.eq.s32.totalorder %s25, 1
      %p111 = por %p109, %p110
      %p112 = scmp.ne.s32.totalorder %s103, %s104
      %p113 = scmp.eq.s32.totalorder %s25, 0
      %p114 = por %p112, %p113
      %p115 = scmp.ne.s32.totalorder %s103, %s104
      %p116 = scmp.eq.s32.totalorder %s26, 1
      %p117 = por %p115, %p116
      %p119 = scmp.ne.s32.totalorder %s104, %s118
      %p120 = scmp.eq.s32.totalorder %s26, 0
      %p121 = por %p119, %p120
      %s123 = sadd.s32 %s122, 1
      %p126 = scmp.eq.s32.totalorder %s20, 1
      %p127 = scmp.ne.s32.totalorder %s122, %s124
      %p128 = scmp.eq.s32.totalorder %s20, 0
      %p129 = por %p127, %p128
      %p130 = scmp.ne.s32.totalorder %s122, %s124
      %p131 = scmp.eq.s32.totalorder %s25, 1
      %p132 = por %p130, %p131
      %p133 = scmp.ne.s32.totalorder %s124, %s125
      %p134 = scmp.eq.s32.totalorder %s25, 0
      %p135 = por %p133, %p134
      %p136 = scmp.ne.s32.totalorder %s124, %s125
      %p137 = scmp.eq.s32.totalorder %s26, 1
      %p138 = por %p136, %p137
      %p140 = scmp.ne.s32.totalorder %s125, %s139
      %p141 = scmp.eq.s32.totalorder %s26, 0
      %p142 = por %p140, %p141
      %s144 = sadd.s32 %s143, 1
      %p147 = scmp.eq.s32.totalorder %s20, 1
      %p148 = scmp.ne.s32.totalorder %s143, %s145
      %p149 = scmp.eq.s32.totalorder %s20, 0
      %p150 = por %p148, %p149
      %p151 = scmp.ne.s32.totalorder %s143, %s145
      %p152 = scmp.eq.s32.totalorder %s25, 1
      %p153 = por %p151, %p152
      %p154 = scmp.ne.s32.totalorder %s145, %s146
      %p155 = scmp.eq.s32.totalorder %s25, 0
      %p156 = por %p154, %p155
      %p157 = scmp.ne.s32.totalorder %s145, %s146
      %p158 = scmp.eq.s32.totalorder %s26, 1
      %p159 = por %p157, %p158
      %p161 = scmp.ne.s32.totalorder %s146, %s160
      %p162 = scmp.eq.s32.totalorder %s26, 0
      %p163 = por %p161, %p162
      %s165 = sadd.s32 %s164, 1
      %p168 = scmp.eq.s32.totalorder %s20, 1
      %p169 = scmp.ne.s32.totalorder %s164, %s166
      %p170 = scmp.eq.s32.totalorder %s20, 0
      %p171 = por %p169, %p170
      %p172 = scmp.ne.s32.totalorder %s164, %s166
      %p173 = scmp.eq.s32.totalorder %s25, 1
      %p174 = por %p172, %p173
      %p175 = scmp.ne.s32.totalorder %s166, %s167
      %p176 = scmp.eq.s32.totalorder %s25, 0
      %p177 = por %p175, %p176
      %p178 = scmp.ne.s32.totalorder %s166, %s167
      %p179 = scmp.eq.s32.totalorder %s26, 1
      %p180 = por %p178, %p179
      %p182 = scmp.ne.s32.totalorder %s167, %s181
      %p183 = scmp.eq.s32.totalorder %s26, 0
      %p184 = por %p182, %p183
      %s186 = sadd.s32 %s185, 1
      %p189 = scmp.eq.s32.totalorder %s20, 1
      %p190 = scmp.ne.s32.totalorder %s185, %s187
      %p191 = scmp.eq.s32.totalorder %s20, 0
      %p192 = por %p190, %p191
      %p193 = scmp.ne.s32.totalorder %s185, %s187
      %p194 = scmp.eq.s32.totalorder %s25, 1
      %p195 = por %p193, %p194
      %p196 = scmp.ne.s32.totalorder %s187, %s188
      %p197 = scmp.eq.s32.totalorder %s25, 0
      %p198 = por %p196, %p197
      %p199 = scmp.ne.s32.totalorder %s187, %s188
      %p200 = scmp.eq.s32.totalorder %s26, 1
      %p201 = por %p199, %p200
      %p203 = scmp.ne.s32.totalorder %s188, %s202
      %p204 = scmp.eq.s32.totalorder %s26, 0
      %p205 = por %p203, %p204
      %s207 = sadd.s32 %s206, 1
      %p210 = scmp.eq.s32.totalorder %s20, 1
      %p211 = scmp.ne.s32.totalorder %s206, %s208
      %p212 = scmp.eq.s32.totalorder %s20, 0
      %p213 = por %p211, %p212
      %p214 = scmp.ne.s32.totalorder %s206, %s208
      %p215 = scmp.eq.s32.totalorder %s25, 1
      %p216 = por %p214, %p215
      %p217 = scmp.ne.s32.totalorder %s208, %s209
      %p218 = scmp.eq.s32.totalorder %s25, 0
      %p219 = por %p217, %p218
      %p220 = scmp.ne.s32.totalorder %s208, %s209
      %p221 = scmp.eq.s32.totalorder %s26, 1
      %p222 = por %p220, %p221
      %p224 = scmp.ne.s32.totalorder %s209, %s223
      %p225 = scmp.eq.s32.totalorder %s26, 0
      %p226 = por %p224, %p225
      %s228 = sadd.s32 %s227, 1
      %p231 = scmp.eq.s32.totalorder %s20, 1
      %p232 = scmp.ne.s32.totalorder %s227, %s229
      %p233 = scmp.eq.s32.totalorder %s20, 0
      %p234 = por %p232, %p233
      %p235 = scmp.ne.s32.totalorder %s227, %s229
      %p236 = scmp.eq.s32.totalorder %s25, 1
      %p237 = por %p235, %p236
      %p238 = scmp.ne.s32.totalorder %s229, %s230
      %p239 = scmp.eq.s32.totalorder %s25, 0
      %p240 = por %p238, %p239
      %p241 = scmp.ne.s32.totalorder %s229, %s230
      %p242 = scmp.eq.s32.totalorder %s26, 1
      %p243 = por %p241, %p242
      %p245 = scmp.ne.s32.totalorder %s230, %s244
      %p246 = scmp.eq.s32.totalorder %s26, 0
      %p247 = por %p245, %p246
      %s249 = sadd.s32 %s248, 1
      %p252 = scmp.eq.s32.totalorder %s20, 1
      %p253 = scmp.ne.s32.totalorder %s248, %s250
      %p254 = scmp.eq.s32.totalorder %s20, 0
      %p255 = por %p253, %p254
      %p256 = scmp.ne.s32.totalorder %s248, %s250
      %p257 = scmp.eq.s32.totalorder %s25, 1
      %p258 = por %p256, %p257
      %p259 = scmp.ne.s32.totalorder %s250, %s251
      %p260 = scmp.eq.s32.totalorder %s25, 0
      %p261 = por %p259, %p260
      %p262 = scmp.ne.s32.totalorder %s250, %s251
      %p263 = scmp.eq.s32.totalorder %s26, 1
      %p264 = por %p262, %p263
      %p266 = scmp.ne.s32.totalorder %s251, %s265
      %p267 = scmp.eq.s32.totalorder %s26, 0
      %p268 = por %p266, %p267
      %s269 = ssub.s32 %s20, %s27
      %p270 = scmp.eq.s32.totalorder %s269, 0
      %s272 = sadd.s32 %s271, 1
      %s273 = scalar_select %p270, %s271, %s272
      %p276 = pneg %p270
      %p277 = scmp.eq.s32.totalorder %s20, 1
      %p278 = por %p276, %p277
      %p279 = scmp.ne.s32.totalorder %s271, %s274
      %p280 = scmp.eq.s32.totalorder %s20, 0
      %p281 = por %p279, %p280
      %p282 = scmp.ne.s32.totalorder %s271, %s274
      %p283 = scmp.eq.s32.totalorder %s25, 1
      %p284 = por %p282, %p283
      %p285 = scmp.ne.s32.totalorder %s274, %s275
      %p286 = scmp.eq.s32.totalorder %s25, 0
      %p287 = por %p285, %p286
      %p288 = scmp.ne.s32.totalorder %s274, %s275
      %p289 = scmp.eq.s32.totalorder %s26, 1
      %p290 = por %p288, %p289
      %p292 = scmp.ne.s32.totalorder %s275, %s291
      %p293 = scmp.eq.s32.totalorder %s26, 0
      %p294 = por %p292, %p293
      %p295 = scmp.le.s32.totalorder 1, %s20
      %p296 = scmp.lt.s32.totalorder %s20, 3
      %p297 = pnand %p295, %p296
      %p298 = pneg %p297
      // Predicated region
      $region9: #{tpu_custom_call.1} parent=5 // pred_check
        _
      $region10: #{tpu_custom_call.1} parent=5 // pred_check_branch
        %300 = sbr.rel (%p297) target = $region12
      $region11: #{tpu_custom_call.1} parent=5 // pred_region
        %s301 = ssub.s32 %s20, 1
        // Predicated region
        $region13: #{tpu_custom_call.1} parent=11 // pred_check
          %p302 = pneg %p93
        $region14: #{tpu_custom_call.1} parent=11 // pred_check_branch
          %304 = sbr.rel (%p302) target = $region16
        $region15: #{tpu_custom_call.1} parent=11 // pred_region
          _
        $region16: #{tpu_custom_call.1} parent=11 // pred_fallthru
          _
        // Predicated region
        $region17: #{tpu_custom_call.1} parent=11 // pred_check
          %p305 = pneg %p114
        $region18: #{tpu_custom_call.1} parent=11 // pred_check_branch
          %307 = sbr.rel (%p305) target = $region20
        $region19: #{tpu_custom_call.1} parent=11 // pred_region
          _
        $region20: #{tpu_custom_call.1} parent=11 // pred_fallthru
          _
        // Predicated region
        $region21: #{tpu_custom_call.1} parent=11 // pred_check
          %p308 = pneg %p135
        $region22: #{tpu_custom_call.1} parent=11 // pred_check_branch
          %310 = sbr.rel (%p308) target = $region24
        $region23: #{tpu_custom_call.1} parent=11 // pred_region
          _
        $region24: #{tpu_custom_call.1} parent=11 // pred_fallthru
          _
        // Predicated region
        $region25: #{tpu_custom_call.1} parent=11 // pred_check
          %p311 = pneg %p156
        $region26: #{tpu_custom_call.1} parent=11 // pred_check_branch
          %313 = sbr.rel (%p311) target = $region28
        $region27: #{tpu_custom_call.1} parent=11 // pred_region
          _
        $region28: #{tpu_custom_call.1} parent=11 // pred_fallthru
          _
        // Predicated region
        $region29: #{tpu_custom_call.1} parent=11 // pred_check
          %p314 = pneg %p177
        $region30: #{tpu_custom_call.1} parent=11 // pred_check_branch
          %316 = sbr.rel (%p314) target = $region32
        $region31: #{tpu_custom_call.1} parent=11 // pred_region
          _
        $region32: #{tpu_custom_call.1} parent=11 // pred_fallthru
          _
        // Predicated region
        $region33: #{tpu_custom_call.1} parent=11 // pred_check
          %p317 = pneg %p198
        $region34: #{tpu_custom_call.1} parent=11 // pred_check_branch
          %319 = sbr.rel (%p317) target = $region36
        $region35: #{tpu_custom_call.1} parent=11 // pred_region
          _
        $region36: #{tpu_custom_call.1} parent=11 // pred_fallthru
          _
        // Predicated region
        $region37: #{tpu_custom_call.1} parent=11 // pred_check
          %p320 = pneg %p219
        $region38: #{tpu_custom_call.1} parent=11 // pred_check_branch
          %322 = sbr.rel (%p320) target = $region40
        $region39: #{tpu_custom_call.1} parent=11 // pred_region
          _
        $region40: #{tpu_custom_call.1} parent=11 // pred_fallthru
          _
        // Predicated region
        $region41: #{tpu_custom_call.1} parent=11 // pred_check
          %p323 = pneg %p240
        $region42: #{tpu_custom_call.1} parent=11 // pred_check_branch
          %325 = sbr.rel (%p323) target = $region44
        $region43: #{tpu_custom_call.1} parent=11 // pred_region
          _
        $region44: #{tpu_custom_call.1} parent=11 // pred_fallthru
          _
        // Predicated region
        $region45: #{tpu_custom_call.1} parent=11 // pred_check
          %p326 = pneg %p261
        $region46: #{tpu_custom_call.1} parent=11 // pred_check_branch
          %328 = sbr.rel (%p326) target = $region48
        $region47: #{tpu_custom_call.1} parent=11 // pred_region
          _
        $region48: #{tpu_custom_call.1} parent=11 // pred_fallthru
          _
      $region12: #{tpu_custom_call.1} parent=5 // pred_fallthru
        _
      %p329 = scmp.lt.s32.totalorder %s20, 2
      // Predicated region
      $region49: #{tpu_custom_call.1} parent=5 // pred_check
        %p330 = pneg %p329
      $region50: #{tpu_custom_call.1} parent=5 // pred_check_branch
        %332 = sbr.rel (%p330) target = $region52
      $region51: #{tpu_custom_call.1} parent=5 // pred_region
        // Predicated region
        $region53: #{tpu_custom_call.1} parent=51 // pred_check
          %p333 = pneg %p40
        $region54: #{tpu_custom_call.1} parent=51 // pred_check_branch
          %335 = sbr.rel (%p333) target = $region56
        $region55: #{tpu_custom_call.1} parent=51 // pred_region
          %p336 = scmp.lt.s32.totalorder %s20, 1
          %s337 = scalar_select %p336, %s20, 1
          %s338 = smul.addr %s337, 5
          %s339 = smul.addr %s338, 8
          %s340 = scalar_lea.vmem %s0, %s339
        $region56: #{tpu_custom_call.1} parent=51 // pred_fallthru
          _
        // Predicated region
        $region57: #{tpu_custom_call.1} parent=51 // pred_check
          %p341 = pneg %p66
        $region58: #{tpu_custom_call.1} parent=51 // pred_check_branch
          %343 = sbr.rel (%p341) target = $region60
        $region59: #{tpu_custom_call.1} parent=51 // pred_region
          %p344 = scmp.lt.s32.totalorder %s20, 1
          %s345 = scalar_select %p344, %s20, 1
          %s346 = smul.addr %s345, 8
          %s347 = scalar_lea.vmem %s1, %s346
        $region60: #{tpu_custom_call.1} parent=51 // pred_fallthru
          _
      $region52: #{tpu_custom_call.1} parent=5 // pred_fallthru
        _
      %p348 = scmp.le.s32.totalorder 1, %s20
      %p349 = scmp.lt.s32.totalorder %s20, 3
      %p350 = pnand %p348, %p349
      %p351 = pneg %p350
      // Predicated region
      $region61: #{tpu_custom_call.1} parent=5 // pred_check
        _
      $region62: #{tpu_custom_call.1} parent=5 // pred_check_branch
        %353 = sbr.rel (%p350) target = $region64
      $region63: #{tpu_custom_call.1} parent=5 // pred_region
        %s354 = ssub.s32 %s20, 1
        %p355 = scmp.lt.s32.totalorder %s25, 1
        %s356 = scalar_select %p355, %s25, 1
        %s357 = smul.addr %s356, 5
        %s358 = smul.addr %s357, 8
        %s359 = scalar_lea.vmem %s0, %s358
        %p360 = pneg %p46
        %p361 = pneg %p43
        %p362 = scmp.lt.s32.totalorder %s25, 1
        %s363 = scalar_select %p362, %s25, 1
        %s364 = smul.addr %s363, 8
        %s365 = scalar_lea.vmem %s1, %s364
        %p366 = pneg %p72
        %p367 = pneg %p69
        %p368 = pneg %p93
        %p369 = pneg %p90
        %p370 = pneg %p114
        %p371 = pneg %p111
        %p372 = pneg %p135
        %p373 = pneg %p132
        %p374 = pneg %p156
        %p375 = pneg %p153
        %p376 = pneg %p177
        %p377 = pneg %p174
        %p378 = pneg %p198
        %p379 = pneg %p195
        %p380 = pneg %p219
        %p381 = pneg %p216
        %p382 = pneg %p240
        %p383 = pneg %p237
        %p384 = pneg %p261
        %p385 = pneg %p258
        %p386 = pneg %p287
        %p387 = pneg %p284
        %s388 = sand.u32 %s274, 1
        %s389 = scalar_lea.sflag [#allocation3], %s388
        %s390 = sand.u32 %s274, 1
        %s391 = smul.addr %s390, 8
        %s392 = scalar_lea.vmem [#allocation2], %s391
        %p393 = scmp.lt.s32.totalorder %s25, 1
        %s394 = scalar_select %p393, %s25, 1
        %s395 = smul.addr %s394, 5
        %s396 = smul.addr %s395, 8
        %s397 = scalar_lea.vmem %s0, %s396
        %p398 = scmp.lt.s32.totalorder %s25, 1
        %s399 = scalar_select %p398, %s25, 1
        %s400 = smul.addr %s399, 8
        %s401 = scalar_lea.vmem %s1, %s400
        %v403 = vld [vmem:[%s397] sm:$0xff]
        %v404 = vld [vmem:[%s397 + $0x8] sm:$0xff]
        %v405 = vld [vmem:[%s397 + $0x10] sm:$0xff]
        %v406 = vld [vmem:[%s397 + $0x18] sm:$0xff]
        %v407 = vld [vmem:[%s397 + $0x20] sm:$0xff]
        %v408 = vadd.f32 %v403, %v404
        %v409 = vadd.f32 %v408, %v405
        %v410 = vadd.f32 %v409, %v406
        %vm411 = vcmask 39936
        %v412 = vsel %vm411, %v407, 0.0
        %v413 = vadd.f32 %v410, %v412
        %414 = vadd.xlane.f32.xlu0 %v413
        %v415 = vpop.xlane.xlu0 %414
        %v416 = vrcp.pop 517.0
        %v417 = vmul.f32 %v415, %v416
        %v418 = vsub.f32 %v403, %v417
        %v419 = vsub.f32 %v404, %v417
        %v420 = vsub.f32 %v405, %v417
        %v421 = vsub.f32 %v406, %v417
        %v422 = vsub.f32 %v407, %v417
        %v423 = vmul.f32 %v418, %v418
        %v424 = vmul.f32 %v419, %v419
        %v425 = vmul.f32 %v420, %v420
        %v426 = vmul.f32 %v421, %v421
        %v427 = vmul.f32 %v422, %v422
        %v428 = vadd.f32 %v423, %v424
        %v429 = vadd.f32 %v428, %v425
        %v430 = vadd.f32 %v429, %v426
        %v431 = vsel %vm411, %v427, 0.0
        %v432 = vadd.f32 %v430, %v431
        %433 = vadd.xlane.f32.xlu0 %v432
        %v434 = vpop.xlane.xlu0 %433
        %v435 = vmul.f32 %v434, %v416
        %v436 = vadd.f32 %v435, 1e-12
        %v437 = vrsqrt.pop %v436
        %v438 = vmul.f32 %v418, %v437
        %v439 = vmul.f32 %v419, %v437
        %v440 = vmul.f32 %v420, %v437
        %v441 = vmul.f32 %v421, %v437
        %v442 = vmul.f32 %v422, %v437
        %v443 = vld [vmem:[%s2] sm:$0x1f]
        %v445 = vlaneseq
        %v446 = vshrl.u32 %v445, 7
        %v447 = vsub.s32 0, %v446
        %v448 = vrot.slane %v443, %v447
        %v449 = vlaneseq
        %v450 = vshrl.u32 %v449, 7
        %v451 = vsub.s32 1, %v450
        %v452 = vrot.slane %v443, %v451
        %v453 = vlaneseq
        %v454 = vshrl.u32 %v453, 7
        %v455 = vsub.s32 2, %v454
        %v456 = vrot.slane %v443, %v455
        %v457 = vlaneseq
        %v458 = vshrl.u32 %v457, 7
        %v459 = vsub.s32 3, %v458
        %v460 = vrot.slane %v443, %v459
        %v461 = vlaneseq
        %v462 = vshrl.u32 %v461, 7
        %v463 = vsub.s32 4, %v462
        %v464 = vrot.slane %v443, %v463
        %v470 = vmul.f32 %v438, %v448
        %v471 = vmul.f32 %v439, %v452
        %v472 = vmul.f32 %v440, %v456
        %v473 = vmul.f32 %v441, %v460
        %v474 = vmul.f32 %v442, %v464
        %v475 = vld [vmem:[%s3] sm:$0x1f]
        %v477 = vlaneseq
        %v478 = vshrl.u32 %v477, 7
        %v479 = vsub.s32 0, %v478
        %v480 = vrot.slane %v475, %v479
        %v481 = vlaneseq
        %v482 = vshrl.u32 %v481, 7
        %v483 = vsub.s32 1, %v482
        %v484 = vrot.slane %v475, %v483
        %v485 = vlaneseq
        %v486 = vshrl.u32 %v485, 7
        %v487 = vsub.s32 2, %v486
        %v488 = vrot.slane %v475, %v487
        %v489 = vlaneseq
        %v490 = vshrl.u32 %v489, 7
        %v491 = vsub.s32 3, %v490
        %v492 = vrot.slane %v475, %v491
        %v493 = vlaneseq
        %v494 = vshrl.u32 %v493, 7
        %v495 = vsub.s32 4, %v494
        %v496 = vrot.slane %v475, %v495
        %v502 = vadd.f32 %v470, %v480
        %v503 = vadd.f32 %v471, %v484
        %v504 = vadd.f32 %v472, %v488
        %v505 = vadd.f32 %v473, %v492
        %v506 = vadd.f32 %v474, %v496
        %v507 = vld [vmem:[%s401] sm:$0xff]
        %v508 = vld [vmem:[%s4] sm:$0xf]
        %v509 = vld [vmem:[%s5] sm:$0x1]
        %v511 = vlaneseq
        %v512 = vshrl.u32 %v511, 7
        %v513 = vsub.s32 0, %v512
        %v514 = vrot.slane %v509, %v513
        %vm516 = vcmask 31744
        %v518 = vsel %vm516, %v507, 0
        %vm520 = vcmask 1043456
        %v522 = vsel %vm520, %v508, 0
        %524 = vmatprep.subr.mxu0 0.0
        %525 = vmatpush1.msra.mxu0 0.0
        %526 = vmatprep.subr.mxu0 0.0
        %527 = vmatpush1.msra.mxu0 0.0
        %528 = vmatprep.subr.mxu0 0.0
        %529 = vmatpush1.msra.mxu0 0.0
        %530 = vmatprep.subr.mxu0 0.0
        %531 = vmatpush1.msra.mxu0 0.0
        %532 = vmatprep.subr.mxu0 0.0
        %533 = vmatpush1.msra.mxu0 0.0
        %534 = vmatprep.subr.mxu0 0.0
        %535 = vmatpush1.msra.mxu0 0.0
        %536 = vmatprep.subr.mxu0 0.0
        %537 = vmatpush1.msra.mxu0 0.0
        %538 = vmatprep.subr.mxu0 0.0
        %539 = vmatpush1.msra.mxu0 0.0
        %540 = vmatprep.subr.mxu0 0.0
        %541 = vmatpush1.msra.mxu0 0.0
        %542 = vmatprep.subr.mxu0 0.0
        %543 = vmatpush1.msra.mxu0 0.0
        %544 = vmatprep.subr.mxu0 0.0
        %545 = vmatpush1.msra.mxu0 0.0
        %546 = vmatprep.subr.mxu0 0.0
        %547 = vmatpush1.msra.mxu0 0.0
        %548 = vmatprep.subr.mxu0 0.0
        %549 = vmatpush1.msra.mxu0 0.0
        %550 = vmatprep.subr.mxu0 0.0
        %551 = vmatpush1.msra.mxu0 0.0
        %552 = vmatprep.subr.mxu0 0.0
        %553 = vmatpush1.msra.mxu0 0.0
        %554 = vmatprep.subr.mxu0 0.0
        %555 = vmatpush1.msra.mxu0 %v522
        %556 = vmatprep.subr.mxu0 0.0
        %557 = vmatpush2.msra.mxu0 0.0
        %558 = vmatprep.subr.mxu0 0.0
        %559 = vmatpush2.msra.mxu0 0.0
        %560 = vmatprep.subr.mxu0 0.0
        %561 = vmatpush2.msra.mxu0 0.0
        %562 = vmatprep.subr.mxu0 0.0
        %563 = vmatpush2.msra.mxu0 0.0
        %564 = vmatprep.subr.mxu0 0.0
        %565 = vmatpush2.msra.mxu0 0.0
        %566 = vmatprep.subr.mxu0 0.0
        %567 = vmatpush2.msra.mxu0 0.0
        %568 = vmatprep.subr.mxu0 0.0
        %569 = vmatpush2.msra.mxu0 0.0
        %570 = vmatprep.subr.mxu0 0.0
        %571 = vmatpush2.msra.mxu0 0.0
        %572 = vmatprep.subr.mxu0 0.0
        %573 = vmatpush2.msra.mxu0 0.0
        %574 = vmatprep.subr.mxu0 0.0
        %575 = vmatpush2.msra.mxu0 0.0
        %576 = vmatprep.subr.mxu0 0.0
        %577 = vmatpush2.msra.mxu0 0.0
        %578 = vmatprep.subr.mxu0 0.0
        %579 = vmatpush2.msra.mxu0 0.0
        %580 = vmatprep.subr.mxu0 0.0
        %581 = vmatpush2.msra.mxu0 0.0
        %582 = vmatprep.subr.mxu0 0.0
        %583 = vmatpush2.msra.mxu0 0.0
        %584 = vmatprep.subr.mxu0 0.0
        %585 = vmatpush2.msra.mxu0 0.0
        %586 = vmatprep.subr.mxu0 0.0
        %587 = vmatpush2.msra.mxu0 0.0
        %588 = vmatprep.mubr.f32.mxu0 0.0
        %589 = vmatmul.mubr.f32.gmra.mxu0 %v518
        %v590 = vpop.f32.mrf.mxu0
        %v591 = vadd.f32 %v514, %v590
        %v592 = vpop.f32.mrf.mxu0
        %593 = vdwg.mxu0
        %v594 = vsel %vm516, %v591, 0.0
        %595 = vadd.xlane.f32.xlu0 %v594
        %v596 = vpop.xlane.xlu0 %595
        %v597 = vrcp.pop 4.0
        %v598 = vmul.f32 %v596, %v597
        %v599 = vsub.f32 %v591, %v598
        %v600 = vmul.f32 %v599, %v599
        %v601 = vsel %vm516, %v600, 0.0
        %602 = vadd.xlane.f32.xlu0 %v601
        %v603 = vpop.xlane.xlu0 %602
        %v604 = vmul.f32 %v603, %v597
        %v605 = vadd.f32 %v604, 1e-12
        %v606 = vrsqrt.pop %v605
        %v607 = vmul.f32 %v599, %v606
        %v608 = vld [vmem:[%s6] sm:$0x1]
        %v610 = vlaneseq
        %v611 = vshrl.u32 %v610, 7
        %v612 = vsub.s32 0, %v611
        %v613 = vrot.slane %v608, %v612
        %v615 = vmul.f32 %v607, %v613
        %v616 = vld [vmem:[%s7] sm:$0x1]
        %v618 = vlaneseq
        %v619 = vshrl.u32 %v618, 7
        %v620 = vsub.s32 0, %v619
        %v621 = vrot.slane %v616, %v620
        %v623 = vadd.f32 %v615, %v621
        %v624 = vpack.c.bf16 %v502, %v502
        %v625 = vpack.c.bf16 %v503, %v503
        %v626 = vpack.c.bf16 %v504, %v504
        %v627 = vpack.c.bf16 %v505, %v505
        %v628 = vpack.c.bf16 %v506, %v506
        %v629 = vld [vmem:[%s8] sm:$0xf]
        %v630 = vld [vmem:[%s8 + $0x4] sm:$0xf]
        %v631 = vld [vmem:[%s8 + $0x8] sm:$0xf]
        %v632 = vld [vmem:[%s8 + $0xc] sm:$0xf]
        %v633 = vld [vmem:[%s8 + $0x10] sm:$0xf]
        %v634 = vld [vmem:[%s8 + $0x14] sm:$0xf]
        %v635 = vld [vmem:[%s8 + $0x18] sm:$0xf]
        %v636 = vld [vmem:[%s8 + $0x1c] sm:$0xf]
        %v637 = vld [vmem:[%s8 + $0x20] sm:$0xf]
        %v638 = vld [vmem:[%s8 + $0x24] sm:$0xf]
        %v639 = vld [vmem:[%s8 + $0x28] sm:$0xf]
        %v640 = vld [vmem:[%s8 + $0x2c] sm:$0xf]
        %v641 = vld [vmem:[%s8 + $0x30] sm:$0xf]
        %v642 = vld [vmem:[%s8 + $0x34] sm:$0xf]
        %v643 = vld [vmem:[%s8 + $0x38] sm:$0xf]
        %v644 = vld [vmem:[%s8 + $0x3c] sm:$0xf]
        %v645 = vld [vmem:[%s8 + $0x40] sm:$0xf]
        %v646 = vld [vmem:[%s8 + $0x44] sm:$0xf]
        %v647 = vld [vmem:[%s8 + $0x48] sm:$0xf]
        %v648 = vld [vmem:[%s8 + $0x4c] sm:$0xf]
        %v649 = vld [vmem:[%s8 + $0x50] sm:$0xf]
        %v650 = vld [vmem:[%s8 + $0x54] sm:$0xf]
        %v651 = vld [vmem:[%s8 + $0x58] sm:$0xf]
        %v652 = vld [vmem:[%s8 + $0x5c] sm:$0xf]
        %v653 = vld [vmem:[%s8 + $0x60] sm:$0xf]
        %v654 = vld [vmem:[%s8 + $0x64] sm:$0xf]
        %v655 = vld [vmem:[%s8 + $0x68] sm:$0xf]
        %v656 = vld [vmem:[%s8 + $0x6c] sm:$0xf]
        %v657 = vld [vmem:[%s8 + $0x70] sm:$0xf]
        %v658 = vld [vmem:[%s8 + $0x74] sm:$0xf]
        %v659 = vld [vmem:[%s8 + $0x78] sm:$0xf]
        %v660 = vld [vmem:[%s8 + $0x7c] sm:$0xf]
        %v661 = vld [vmem:[%s8 + $0x80] sm:$0xf]
        %v662 = vld [vmem:[%s8 + $0x84] sm:$0xf]
        %v663 = vld [vmem:[%s8 + $0x88] sm:$0xf]
        %v664 = vld [vmem:[%s8 + $0x8c] sm:$0xf]
        %v665 = vld [vmem:[%s8 + $0x90] sm:$0xf]
        %v666 = vld [vmem:[%s8 + $0x94] sm:$0xf]
        %v667 = vld [vmem:[%s8 + $0x98] sm:$0xf]
        %v668 = vld [vmem:[%s8 + $0x9c] sm:$0xf]
        %v669 = vld [vmem:[%s8 + $0xa0] sm:$0xf]
        %v670 = vld [vmem:[%s8 + $0xa4] sm:$0xf]
        %v671 = vld [vmem:[%s8 + $0xa8] sm:$0xf]
        %v672 = vld [vmem:[%s8 + $0xac] sm:$0xf]
        %v673 = vld [vmem:[%s8 + $0xb0] sm:$0xf]
        %v674 = vld [vmem:[%s8 + $0xb4] sm:$0xf]
        %v675 = vld [vmem:[%s8 + $0xb8] sm:$0xf]
        %v676 = vld [vmem:[%s8 + $0xbc] sm:$0xf]
        %v677 = vld [vmem:[%s8 + $0xc0] sm:$0xf]
        %v678 = vld [vmem:[%s8 + $0xc4] sm:$0xf]
        %v679 = vld [vmem:[%s8 + $0xc8] sm:$0xf]
        %v680 = vld [vmem:[%s8 + $0xcc] sm:$0xf]
        %v681 = vld [vmem:[%s8 + $0xd0] sm:$0xf]
        %v682 = vld [vmem:[%s8 + $0xd4] sm:$0xf]
        %v683 = vld [vmem:[%s8 + $0xd8] sm:$0xf]
        %v684 = vld [vmem:[%s8 + $0xdc] sm:$0xf]
        %v685 = vld [vmem:[%s8 + $0xe0] sm:$0xf]
        %v686 = vld [vmem:[%s8 + $0xe4] sm:$0xf]
        %v687 = vld [vmem:[%s8 + $0xe8] sm:$0xf]
        %v688 = vld [vmem:[%s8 + $0xec] sm:$0xf]
        %v689 = vld [vmem:[%s8 + $0xf0] sm:$0xf]
        %v690 = vld [vmem:[%s8 + $0xf4] sm:$0xf]
        %v691 = vld [vmem:[%s8 + $0xf8] sm:$0xf]
        %v692 = vld [vmem:[%s8 + $0xfc] sm:$0xf]
        %v693 = vld [vmem:[%s8 + $0x100] sm:$0x7]
        %v694 = vpack.c.bf16 %v623, %v623
        %v695 = vld [vmem:[%s9] sm:$0x3]
        %v697 = vsel %vm516, %v694, 0
        %vm699 = vcmask 1041408
        %v701 = vsel %vm699, %v695, 0
        %703 = vmatprep.subr.bf16.mxu0 0
        %704 = vmatpush1.bf16.msra.mxu0 0
        %705 = vmatprep.subr.bf16.mxu0 0
        %706 = vmatpush1.bf16.msra.mxu0 0
        %707 = vmatprep.subr.bf16.mxu0 0
        %708 = vmatpush1.bf16.msra.mxu0 0
        %709 = vmatprep.subr.bf16.mxu0 0
        %710 = vmatpush1.bf16.msra.mxu0 0
        %711 = vmatprep.subr.bf16.mxu0 0
        %712 = vmatpush1.bf16.msra.mxu0 0
        %713 = vmatprep.subr.bf16.mxu0 0
        %714 = vmatpush1.bf16.msra.mxu0 0
        %715 = vmatprep.subr.bf16.mxu0 0
        %716 = vmatpush1.bf16.msra.mxu0 0
        %717 = vmatprep.subr.bf16.mxu0 0
        %718 = vmatpush1.bf16.msra.mxu0 %v701
        %719 = vmatprep.subr.bf16.mxu0 0
        %720 = vmatpush2.bf16.msra.mxu0 0
        %721 = vmatprep.subr.bf16.mxu0 0
        %722 = vmatpush2.bf16.msra.mxu0 0
        %723 = vmatprep.subr.bf16.mxu0 0
        %724 = vmatpush2.bf16.msra.mxu0 0
        %725 = vmatprep.subr.bf16.mxu0 0
        %726 = vmatpush2.bf16.msra.mxu0 0
        %727 = vmatprep.subr.bf16.mxu0 0
        %728 = vmatpush2.bf16.msra.mxu0 0
        %729 = vmatprep.subr.bf16.mxu0 0
        %730 = vmatpush2.bf16.msra.mxu0 0
        %731 = vmatprep.subr.bf16.mxu0 0
        %732 = vmatpush2.bf16.msra.mxu0 0
        %733 = vmatprep.subr.bf16.mxu0 0
        %734 = vmatpush2.bf16.msra.mxu0 0
        %735 = vmatprep.mubr.bf16.mxu0 0
        %736 = vmatmul.mubr.bf16.gmra.mxu0 %v697
        %v737 = vpop.f32.mrf.mxu0
        %v738 = vadd.f32 0.0, %v737
        %v739 = vpop.f32.mrf.mxu0
        %v740 = vpop.f32.mrf.mxu0
        %v741 = vpop.f32.mrf.mxu0
        %742 = vdwg.mxu0
        %v808 = vunpack.c.l.b16 %v629
        %v809 = vunpack.c.l.b16 %v630
        %v810 = vunpack.c.l.b16 %v631
        %v811 = vunpack.c.l.b16 %v632
        %v812 = vunpack.c.l.b16 %v633
        %v813 = vunpack.c.l.b16 %v634
        %v814 = vunpack.c.l.b16 %v635
        %v815 = vunpack.c.l.b16 %v636
        %v816 = vunpack.c.l.b16 %v637
        %v817 = vunpack.c.l.b16 %v638
        %v818 = vunpack.c.l.b16 %v639
        %v819 = vunpack.c.l.b16 %v640
        %v820 = vunpack.c.l.b16 %v641
        %v821 = vunpack.c.l.b16 %v642
        %v822 = vunpack.c.l.b16 %v643
        %v823 = vunpack.c.l.b16 %v644
        %v824 = vunpack.c.l.b16 %v645
        %v825 = vunpack.c.l.b16 %v646
        %v826 = vunpack.c.l.b16 %v647
        %v827 = vunpack.c.l.b16 %v648
        %v828 = vunpack.c.l.b16 %v649
        %v829 = vunpack.c.l.b16 %v650
        %v830 = vunpack.c.l.b16 %v651
        %v831 = vunpack.c.l.b16 %v652
        %v832 = vunpack.c.l.b16 %v653
        %v833 = vunpack.c.l.b16 %v654
        %v834 = vunpack.c.l.b16 %v655
        %v835 = vunpack.c.l.b16 %v656
        %v836 = vunpack.c.l.b16 %v657
        %v837 = vunpack.c.l.b16 %v658
        %v838 = vunpack.c.l.b16 %v659
        %v839 = vunpack.c.l.b16 %v660
        %v840 = vunpack.c.l.b16 %v661
        %v841 = vunpack.c.l.b16 %v662
        %v842 = vunpack.c.l.b16 %v663
        %v843 = vunpack.c.l.b16 %v664
        %v844 = vunpack.c.l.b16 %v665
        %v845 = vunpack.c.l.b16 %v666
        %v846 = vunpack.c.l.b16 %v667
        %v847 = vunpack.c.l.b16 %v668
        %v848 = vunpack.c.l.b16 %v669
        %v849 = vunpack.c.l.b16 %v670
        %v850 = vunpack.c.l.b16 %v671
        %v851 = vunpack.c.l.b16 %v672
        %v852 = vunpack.c.l.b16 %v673
        %v853 = vunpack.c.l.b16 %v674
        %v854 = vunpack.c.l.b16 %v675
        %v855 = vunpack.c.l.b16 %v676
        %v856 = vunpack.c.l.b16 %v677
        %v857 = vunpack.c.l.b16 %v678
        %v858 = vunpack.c.l.b16 %v679
        %v859 = vunpack.c.l.b16 %v680
        %v860 = vunpack.c.l.b16 %v681
        %v861 = vunpack.c.l.b16 %v682
        %v862 = vunpack.c.l.b16 %v683
        %v863 = vunpack.c.l.b16 %v684
        %v864 = vunpack.c.l.b16 %v685
        %v865 = vunpack.c.l.b16 %v686
        %v866 = vunpack.c.l.b16 %v687
        %v867 = vunpack.c.l.b16 %v688
        %v868 = vunpack.c.l.b16 %v689
        %v869 = vunpack.c.l.b16 %v690
        %v870 = vunpack.c.l.b16 %v691
        %v871 = vunpack.c.l.b16 %v692
        %v872 = vunpack.c.l.b16 %v693
        %v873 = vpack.c.b16 %v809, %v808
        %v874 = vpack.c.b16 %v811, %v810
        %v875 = vpack.c.b16 %v813, %v812
        %v876 = vpack.c.b16 %v815, %v814
        %v877 = vpack.c.b16 %v817, %v816
        %v878 = vpack.c.b16 %v819, %v818
        %v879 = vpack.c.b16 %v821, %v820
        %v880 = vpack.c.b16 %v823, %v822
        %v881 = vpack.c.b16 %v825, %v824
        %v882 = vpack.c.b16 %v827, %v826
        %v883 = vpack.c.b16 %v829, %v828
        %v884 = vpack.c.b16 %v831, %v830
        %v885 = vpack.c.b16 %v833, %v832
        %v886 = vpack.c.b16 %v835, %v834
        %v887 = vpack.c.b16 %v837, %v836
        %v888 = vpack.c.b16 %v839, %v838
        %v889 = vpack.c.b16 %v841, %v840
        %v890 = vpack.c.b16 %v843, %v842
        %v891 = vpack.c.b16 %v845, %v844
        %v892 = vpack.c.b16 %v847, %v846
        %v893 = vpack.c.b16 %v849, %v848
        %v894 = vpack.c.b16 %v851, %v850
        %v895 = vpack.c.b16 %v853, %v852
        %v896 = vpack.c.b16 %v855, %v854
        %v897 = vpack.c.b16 %v857, %v856
        %v898 = vpack.c.b16 %v859, %v858
        %v899 = vpack.c.b16 %v861, %v860
        %v900 = vpack.c.b16 %v863, %v862
        %v901 = vpack.c.b16 %v865, %v864
        %v902 = vpack.c.b16 %v867, %v866
        %v903 = vpack.c.b16 %v869, %v868
        %v904 = vpack.c.b16 %v871, %v870
        %v905 = vpack.c.b16 %v872, %v872
        %v939 = vsel %vm411, %v628, 0
        %vm941 = vcmask 1042432
        %v942 = vsel %vm699, 4294967295, 65535
        %v943 = vsel %vm941, %v942, 0
        %v945 = vand.u32 %v905, %v943
        %947 = vmatprep.subr.bf16.mxu0 0
        %948 = vmatpush1.bf16.msra.mxu0 %v880
        %949 = vmatprep.subr.bf16.mxu0 0
        %950 = vmatpush1.bf16.msra.mxu0 %v879
        %951 = vmatprep.subr.bf16.mxu0 0
        %952 = vmatpush1.bf16.msra.mxu0 %v878
        %953 = vmatprep.subr.bf16.mxu0 0
        %954 = vmatpush1.bf16.msra.mxu0 %v877
        %955 = vmatprep.subr.bf16.mxu0 0
        %956 = vmatpush1.bf16.msra.mxu0 %v876
        %957 = vmatprep.subr.bf16.mxu0 0
        %958 = vmatpush1.bf16.msra.mxu0 %v875
        %959 = vmatprep.subr.bf16.mxu0 0
        %960 = vmatpush1.bf16.msra.mxu0 %v874
        %961 = vmatprep.subr.bf16.mxu0 0
        %962 = vmatpush1.bf16.msra.mxu0 %v873
        %963 = vmatprep.subr.bf16.mxu0 0
        %964 = vmatpush2.bf16.msra.mxu0 %v888
        %965 = vmatprep.subr.bf16.mxu0 0
        %966 = vmatpush2.bf16.msra.mxu0 %v887
        %967 = vmatprep.subr.bf16.mxu0 0
        %968 = vmatpush2.bf16.msra.mxu0 %v886
        %969 = vmatprep.subr.bf16.mxu0 0
        %970 = vmatpush2.bf16.msra.mxu0 %v885
        %971 = vmatprep.subr.bf16.mxu0 0
        %972 = vmatpush2.bf16.msra.mxu0 %v884
        %973 = vmatprep.subr.bf16.mxu0 0
        %974 = vmatpush2.bf16.msra.mxu0 %v883
        %975 = vmatprep.subr.bf16.mxu0 0
        %976 = vmatpush2.bf16.msra.mxu0 %v882
        %977 = vmatprep.subr.bf16.mxu0 0
        %978 = vmatpush2.bf16.msra.mxu0 %v881
        %979 = vmatprep.mubr.bf16.mxu0 %v625
        %980 = vmatmul.mubr.bf16.gmra.mxu0 %v624
        %v981 = vpop.f32.mrf.mxu0
        %v982 = vadd.f32 %v738, %v981
        %v983 = vpop.f32.mrf.mxu0
        %v984 = vpop.f32.mrf.mxu0
        %v985 = vpop.f32.mrf.mxu0
        %986 = vdwg.mxu0
        %987 = vmatprep.subr.bf16.mxu0 0
        %988 = vmatpush1.bf16.msra.mxu0 %v896
        %989 = vmatprep.subr.bf16.mxu0 0
        %990 = vmatpush1.bf16.msra.mxu0 %v895
        %991 = vmatprep.subr.bf16.mxu0 0
        %992 = vmatpush1.bf16.msra.mxu0 %v894
        %993 = vmatprep.subr.bf16.mxu0 0
        %994 = vmatpush1.bf16.msra.mxu0 %v893
        %995 = vmatprep.subr.bf16.mxu0 0
        %996 = vmatpush1.bf16.msra.mxu0 %v892
        %997 = vmatprep.subr.bf16.mxu0 0
        %998 = vmatpush1.bf16.msra.mxu0 %v891
        %999 = vmatprep.subr.bf16.mxu0 0
        %1000 = vmatpush1.bf16.msra.mxu0 %v890
        %1001 = vmatprep.subr.bf16.mxu0 0
        %1002 = vmatpush1.bf16.msra.mxu0 %v889
        %1003 = vmatprep.subr.bf16.mxu0 0
        %1004 = vmatpush2.bf16.msra.mxu0 %v904
        %1005 = vmatprep.subr.bf16.mxu0 0
        %1006 = vmatpush2.bf16.msra.mxu0 %v903
        %1007 = vmatprep.subr.bf16.mxu0 0
        %1008 = vmatpush2.bf16.msra.mxu0 %v902
        %1009 = vmatprep.subr.bf16.mxu0 0
        %1010 = vmatpush2.bf16.msra.mxu0 %v901
        %1011 = vmatprep.subr.bf16.mxu0 0
        %1012 = vmatpush2.bf16.msra.mxu0 %v900
        %1013 = vmatprep.subr.bf16.mxu0 0
        %1014 = vmatpush2.bf16.msra.mxu0 %v899
        %1015 = vmatprep.subr.bf16.mxu0 0
        %1016 = vmatpush2.bf16.msra.mxu0 %v898
        %1017 = vmatprep.subr.bf16.mxu0 0
        %1018 = vmatpush2.bf16.msra.mxu0 %v897
        %1019 = vmatprep.mubr.bf16.mxu0 %v627
        %1020 = vmatmul.mubr.bf16.gmra.mxu0 %v626
        %v1021 = vpop.f32.mrf.mxu0
        %v1022 = vadd.f32 %v982, %v1021
        %v1023 = vpop.f32.mrf.mxu0
        %v1024 = vpop.f32.mrf.mxu0
        %v1025 = vpop.f32.mrf.mxu0
        %1026 = vdwg.mxu0
        %1027 = vmatprep.subr.bf16.mxu0 0
        %1028 = vmatpush1.bf16.msra.mxu0 0
        %1029 = vmatprep.subr.bf16.mxu0 0
        %1030 = vmatpush1.bf16.msra.mxu0 0
        %1031 = vmatprep.subr.bf16.mxu0 0
        %1032 = vmatpush1.bf16.msra.mxu0 0
        %1033 = vmatprep.subr.bf16.mxu0 0
        %1034 = vmatpush1.bf16.msra.mxu0 0
        %1035 = vmatprep.subr.bf16.mxu0 0
        %1036 = vmatpush1.bf16.msra.mxu0 0
        %1037 = vmatprep.subr.bf16.mxu0 0
        %1038 = vmatpush1.bf16.msra.mxu0 0
        %1039 = vmatprep.subr.bf16.mxu0 0
        %1040 = vmatpush1.bf16.msra.mxu0 0
        %1041 = vmatprep.subr.bf16.mxu0 0
        %1042 = vmatpush1.bf16.msra.mxu0 %v945
        %1043 = vmatprep.subr.bf16.mxu0 0
        %1044 = vmatpush2.bf16.msra.mxu0 0
        %1045 = vmatprep.subr.bf16.mxu0 0
        %1046 = vmatpush2.bf16.msra.mxu0 0
        %1047 = vmatprep.subr.bf16.mxu0 0
        %1048 = vmatpush2.bf16.msra.mxu0 0
        %1049 = vmatprep.subr.bf16.mxu0 0
        %1050 = vmatpush2.bf16.msra.mxu0 0
        %1051 = vmatprep.subr.bf16.mxu0 0
        %1052 = vmatpush2.bf16.msra.mxu0 0
        %1053 = vmatprep.subr.bf16.mxu0 0
        %1054 = vmatpush2.bf16.msra.mxu0 0
        %1055 = vmatprep.subr.bf16.mxu0 0
        %1056 = vmatpush2.bf16.msra.mxu0 0
        %1057 = vmatprep.subr.bf16.mxu0 0
        %1058 = vmatpush2.bf16.msra.mxu0 0
        %1059 = vmatprep.mubr.bf16.mxu0 0
        %1060 = vmatmul.mubr.bf16.gmra.mxu0 %v939
        %v1061 = vpop.f32.mrf.mxu0
        %v1062 = vadd.f32 %v1022, %v1061
        %v1063 = vpop.f32.mrf.mxu0
        %v1064 = vpop.f32.mrf.mxu0
        %v1065 = vpop.f32.mrf.mxu0
        %1066 = vdwg.mxu0
        %v1067 = vld [vmem:[%s10] sm:$0x1]
        %v1069 = vlaneseq
        %v1070 = vshrl.u32 %v1069, 7
        %v1071 = vsub.s32 0, %v1070
        %v1072 = vrot.slane %v1067, %v1071
        %v1074 = vadd.f32 %v1062, %v1072
        %vm1075 = vcmask 523264
        %1076 = vst.msk [vmem:[%s392] sm:$0xff] %vm1075, %v1074
        %s1077 = sand.u32 %s274, 1
        %s1078 = scalar_lea.sflag [#allocation3], %s1077
        %s1079 = sand.u32 %s274, 1
        %s1080 = smul.addr %s1079, 8
        %s1081 = scalar_lea.vmem [#allocation2], %s1080
        // Predicated region
        $region65: #{tpu_custom_call.1} parent=63 // pred_check
          %p1082 = pneg %p284
        $region66: #{tpu_custom_call.1} parent=63 // pred_check_branch
          %1084 = sbr.rel (%p1082) target = $region68
        $region67: #{tpu_custom_call.1} parent=63 // pred_region
          %s1086 = ssub.s32 128, 128
          %1087 = vsyncadd %s1078, %s1086
          %s1088 = smul.addr %s25, 128
          %s1089 = scalar_lea.hbm %s11, %s1088
          %s1091 = sshll.u32 %s1081, 4
          %s1092 = int_to_ptr.vmem [resolvable:$true] %s1091
          %1094 = dma.vmem_to_hbm [thread:$0]  %s1092, 128, %s1089, %s1078
        $region68: #{tpu_custom_call.1} parent=63 // pred_fallthru
          _
      $region64: #{tpu_custom_call.1} parent=5 // pred_fallthru
        _
      %p1095 = scmp.le.s32.totalorder 2, %s20
      // Predicated region
      $region69: #{tpu_custom_call.1} parent=5 // pred_check
        %p1096 = pneg %p1095
      $region70: #{tpu_custom_call.1} parent=5 // pred_check_branch
        %1098 = sbr.rel (%p1096) target = $region72
      $region71: #{tpu_custom_call.1} parent=5 // pred_region
        %s1099 = ssub.s32 %s20, 2
        // Predicated region
        $region73: #{tpu_custom_call.1} parent=71 // pred_check
          %p1100 = pneg %p290
        $region74: #{tpu_custom_call.1} parent=71 // pred_check_branch
          %1102 = sbr.rel (%p1100) target = $region76
        $region75: #{tpu_custom_call.1} parent=71 // pred_region
          %s1103 = sand.u32 %s275, 1
          %s1104 = scalar_lea.sflag [#allocation3], %s1103
          %s1105 = sand.u32 %s275, 1
          %s1106 = smul.addr %s1105, 8
          %s1107 = scalar_lea.vmem [#allocation2], %s1106
          %1108 = dma.done %s1104, 128
        $region76: #{tpu_custom_call.1} parent=71 // pred_fallthru
          _
      $region72: #{tpu_custom_call.1} parent=5 // pred_fallthru
        _
    $region6: #{tpu_custom_call.1} parent=1 // loop_footer
      %s24 = sadd.s32 1, %s20
    $region7: #{tpu_custom_call.1} parent=1 // loop_footer_branch
      %19 = sbr.rel target = $region3
    $region8: #{tpu_custom_call.1} parent=1 // loop_exit
      _
    %1109 = vsyncpa [#allocation3], 1
    %s1110 = scalar_lea.sflag [#allocation3], 1
    %1111 = vsyncpa %s1110, 1

</llo_original>
